<compile_context>
chip_gen: v7x
topology: tpu7x:2x2x1
jax: 0.10.0
libtpu: 0.0.40
codegen_flags: <defaults>
</compile_context>

<pallas_src>
import math

import jax
import jax.numpy as jnp
from jax.experimental import pallas as pl
from jax.experimental.pallas import tpu as pltpu


def _round_up(x: int, m: int) -> int:
    return ((x + m - 1) // m) * m


def _sublane_pack(dt) -> int:
    # Native sublane packing per element width (f32:8, bf16:16, i8:32).
    return {1: 32, 2: 16, 4: 8, 8: 8}.get(jnp.dtype(dt).itemsize, 8)


def _vmem_capacity_bytes() -> int:
    """Per-generation physical VMEM size; conservative (v7x) default."""
    try:
        cap = int(pltpu.get_tpu_info().vmem_capacity_bytes)
        if cap > 0:
            return cap
    except Exception:
        pass
    return 64 * 1024 * 1024


# --------------------------------------------------------------------------
# Kernels
# --------------------------------------------------------------------------
def _concat_dma_kernel(*refs):
    """refs = (in_hbm_0, ..., in_hbm_{n-1}, out_hbm, dma_sems).

    Pure data movement: one HBM->HBM DMA per input into its column window of
    the output.  All copies are started before any wait so the DMA engines
    overlap them; no VMEM round-trip, no vector load/store work.
    """
    *in_refs, out_ref, sems = refs
    copies = []
    off = 0
    for i, r in enumerate(in_refs):
        w = r.shape[1]  # static
        cp = pltpu.make_async_copy(r, out_ref.at[:, pl.ds(off, w)], sems.at[i])
        cp.start()
        copies.append(cp)
        off += w
    for cp in copies:
        cp.wait()


def _concat_cast_kernel(*refs):
    """refs = (in_tile_0, ..., in_tile_{n-1}, out_tile); 2-D VMEM row tiles.

    Used only when inputs need dtype promotion (DMA cannot cast).  The cast
    runs on the VPU inside this mem-bound copy (VALU slot has huge slack),
    avoiding a separate XLA astype pass through HBM.
    """
    *in_refs, out_ref = refs
    off = 0
    for r in in_refs:
        w = r.shape[1]  # static
        out_ref[:, off:off + w] = r[...].astype(out_ref.dtype)
        off += w


# --------------------------------------------------------------------------
# Path dispatchers
# --------------------------------------------------------------------------
def _concat_dma(flats, widths, L, total, out_dtype):
    n = len(flats)
    return pl.pallas_call(
        _concat_dma_kernel,
        out_shape=jax.ShapeDtypeStruct((L, total), out_dtype),
        in_specs=[pl.BlockSpec(memory_space=pl.ANY) for _ in flats],
        out_specs=pl.BlockSpec(memory_space=pl.ANY),
        scratch_shapes=[pltpu.SemaphoreType.DMA((n,))],
    )(*flats)


def _concat_vmem_cast(flats, widths, dtypes, L, total, out_dtype):
    out_itemsize = jnp.dtype(out_dtype).itemsize
    pack = max(_sublane_pack(dt) for dt in list(dtypes) + [out_dtype])

    # Lane-padded per-row footprint of one tile (all inputs + output).
    bytes_per_row = sum(_round_up(w, 128) * jnp.dtype(dt).itemsize
                        for w, dt in zip(widths, dtypes))
    bytes_per_row += _round_up(total, 128) * out_itemsize

    # Per-generation VMEM budget: ~96 MiB limit / 48 MiB double-buffered
    # working set on v5e/v6e (128 MiB physical), ~48 / 24 MiB on v7x (64 MiB).
    vmem_cap = _vmem_capacity_bytes()
    vmem_limit = min((vmem_cap * 3) // 4, 96 * 1024 * 1024)
    vmem_budget = vmem_limit // 2

    too_small = L < 2 * pack                       # cannot get >= 2 row tiles
    too_wide = 2 * pack * bytes_per_row > vmem_budget
    if too_small or too_wide:
        # XLA concat (plus promotion) is a pure fused DMA and optimal here;
        # a single-step pallas_call would add a VMEM round-trip for nothing.
        return jnp.concatenate([f.astype(out_dtype) for f in flats], axis=1)

    tile_l = vmem_budget // (2 * bytes_per_row)
    tile_l = max(pack, (tile_l // pack) * pack)
    # Force >= 2 grid steps so the runtime pipelines HBM<->VMEM DMAs and v7x
    # can shard the parallel axis across its two TensorCores.
    half = _round_up((L + 1) // 2, pack)
    tile_l = min(tile_l, half)
    grid = (pl.cdiv(L, tile_l),)

    return pl.pallas_call(
        _concat_cast_kernel,
        out_shape=jax.ShapeDtypeStruct((L, total), out_dtype),
        grid=grid,
        in_specs=[pl.BlockSpec((tile_l, w), lambda i: (i, 0)) for w in widths],
        out_specs=pl.BlockSpec((tile_l, total), lambda i: (i, 0)),
        compiler_params=pltpu.CompilerParams(
            dimension_semantics=("parallel",),
            vmem_limit_bytes=vmem_limit,
        ),
    )(*flats)


# --------------------------------------------------------------------------
# Public wrapper (forward pass of ebtorch.nn.Concatenate)
# --------------------------------------------------------------------------
def pallas_concatenate(tensors, dim: int = 1, flatten: bool = False):
    tensors = list(tensors)
    if not tensors:
        raise ValueError("Concatenate requires at least one input tensor")

    if flatten:
        if any(t.ndim < 2 for t in tensors):
            raise ValueError("flatten=True requires every input to have ndim >= 2")
        tensors = [t.reshape(t.shape[0], -1) for t in tensors]

    rank = tensors[0].ndim
    if any(t.ndim != rank for t in tensors):
        raise ValueError("torch.cat requires all inputs to have the same rank")
    if not (-rank <= dim < rank):
        raise ValueError(f"dim {dim} out of range for tensors of rank {rank}")
    d = dim % rank

    ref_shape = tensors[0].shape
    for t in tensors:
        if t.shape[:d] != ref_shape[:d] or t.shape[d + 1:] != ref_shape[d + 1:]:
            raise ValueError("all non-concatenated dimensions must match")

    lead = ref_shape[:d]
    trail = ref_shape[d + 1:]
    L = math.prod(lead)
    T = math.prod(trail)

    # torch.cat-style dtype promotion across inputs.
    out_dtype = jnp.result_type(*tensors)
    out_itemsize = jnp.dtype(out_dtype).itemsize
    cat_dim_size = sum(int(t.shape[d]) for t in tensors)
    out_nd_shape = (*lead, cat_dim_size, *trail)

    flats, widths, dtypes = [], [], []
    for t in tensors:
        w = int(t.shape[d]) * T
        if w == 0:  # empty along the cat dim contributes nothing
            continue
        flats.append(t.reshape(L, w))   # metadata-only; original dtype kept
        widths.append(w)
        dtypes.append(jnp.dtype(t.dtype))
    total = sum(widths)

    if total == 0 or L == 0:
        return jnp.zeros(out_nd_shape, dtype=out_dtype)

    # Tiny problems: pallas_call launch overhead dominates; XLA's native
    # concatenate is already a pure fused DMA there.
    if L * total * out_itemsize < (64 << 10):
        out2d = jnp.concatenate([f.astype(out_dtype) for f in flats], axis=1)
        return out2d.reshape(out_nd_shape)

    if all(dt == jnp.dtype(out_dtype) for dt in dtypes):
        out2d = _concat_dma(flats, widths, L, total, out_dtype)
    else:
        out2d = _concat_vmem_cast(flats, widths, dtypes, L, total, out_dtype)
    return out2d.reshape(out_nd_shape)


if __name__ == "__main__":
    key = jax.random.PRNGKey(0)
    k1, k2, k3, k4, k5, k6, k7, k8, k9, k10 = jax.random.split(key, 10)

    # Case 1: flatten=False, dim=1, NCHW conv-style feature maps (DMA path).
    a = jax.random.normal(k1, (8, 16, 16, 16), dtype=jnp.float32)
    b = jax.random.normal(k2, (8, 8, 16, 16), dtype=jnp.float32)
    c = jax.random.normal(k3, (8, 4, 16, 16), dtype=jnp.float32)
    out1 = jax.block_until_ready(pallas_concatenate([a, b, c], dim=1, flatten=False))
    ref1 = jnp.concatenate([a, b, c], axis=1)
    assert out1.shape == (8, 28, 16, 16), out1.shape
    assert jnp.array_equal(out1, ref1), "mismatch in flatten=False DMA case"

    # Case 2: flatten=True, dim=1, mixed-rank inputs (DMA path).
    d_in = jax.random.normal(k4, (8, 32), dtype=jnp.float32)
    out2 = jax.block_until_ready(pallas_concatenate([a, d_in], dim=1, flatten=True))
    ref2 = jnp.concatenate([a.reshape(8, -1), d_in], axis=1)
    assert out2.shape == (8, 16 * 16 * 16 + 32), out2.shape
    assert jnp.array_equal(out2, ref2), "mismatch in flatten=True DMA case"

    # Case 3: tiny inputs, negative dim, mixed dtypes (XLA fallback + promotion).
    e = jax.random.normal(k5, (2, 4, 8), dtype=jnp.float32)
    f = jax.random.normal(k6, (2, 4, 8), dtype=jnp.bfloat16)
    out3 = jax.block_until_ready(pallas_concatenate([e, f], dim=-1))
    ref3 = jnp.concatenate([e, f.astype(jnp.float32)], axis=-1)
    assert out3.shape == (2, 4, 16), out3.shape
    assert out3.dtype == jnp.float32, out3.dtype
    assert jnp.array_equal(out3, ref3), "mismatch in small-input/promotion case"

    # Case 4: mixed dtypes, larger problem (row-tiled VMEM path, in-kernel cast).
    g = jax.random.normal(k7, (64, 512), dtype=jnp.float32)
    h = jax.random.normal(k8, (64, 256), dtype=jnp.bfloat16)
    out4 = jax.block_until_ready(pallas_concatenate([g, h], dim=1))
    ref4 = jnp.concatenate([g, h.astype(jnp.float32)], axis=1)
    assert out4.shape == (64, 768), out4.shape
    assert out4.dtype == jnp.float32, out4.dtype
    assert jnp.array_equal(out4, ref4), "mismatch in mixed-dtype VMEM-cast case"

    # Case 5: concat along a middle dim of 4-D tensors (DMA path, L > 1, T > 1).
    p = jax.random.normal(k9, (2, 4, 24, 128), dtype=jnp.float32)
    q = jax.random.normal(k10, (2, 4, 8, 128), dtype=jnp.float32)
    out5 = jax.block_until_ready(pallas_concatenate([p, q], dim=2))
    ref5 = jnp.concatenate([p, q], axis=2)
    assert out5.shape == (2, 4, 32, 128), out5.shape
    assert jnp.array_equal(out5, ref5), "mismatch in middle-dim DMA case"

    print("KERNEL_OK")
</pallas_src>

<mosaic_0001>
module attributes {stable_mosaic.version = 11 : i64} {
  func.func @_concat_dma_kernel(%arg0: memref<8x4096xf32, #tpu.memory_space<any>>, %arg1: memref<8x2048xf32, #tpu.memory_space<any>>, %arg2: memref<8x1024xf32, #tpu.memory_space<any>>, %arg3: memref<8x7168xf32, #tpu.memory_space<any>>, %arg4: memref<3x!tpu.dma_semaphore, #tpu.memory_space<semaphore_mem>>) attributes {dimension_semantics = [], scalar_prefetch = 0 : i64, scratch_operands = 1 : i64, tpu.core_type = #tpu.core_type<tc>} {
    %c0_i32 = arith.constant 0 : i32
    %c0_i32_0 = arith.constant 0 : i32
    %c0_i32_1 = arith.constant 0 : i32
    %0 = tpu.memref_slice %arg3[%c0_i32_0, %c0_i32_1] : memref<8x7168xf32, #tpu.memory_space<any>> -> memref<8x4096xf32, #tpu.memory_space<any>>
    %1 = tpu.memref_slice %arg4[%c0_i32] : memref<3x!tpu.dma_semaphore, #tpu.memory_space<semaphore_mem>> -> memref<1x!tpu.dma_semaphore, #tpu.memory_space<semaphore_mem>>
    %2 = tpu.memref_squeeze %1 : memref<1x!tpu.dma_semaphore, #tpu.memory_space<semaphore_mem>> -> memref<!tpu.dma_semaphore, #tpu.memory_space<semaphore_mem>>
    tpu.enqueue_dma source(%arg0 : memref<8x4096xf32, #tpu.memory_space<any>>) target(%0 : memref<8x4096xf32, #tpu.memory_space<any>>) target_semaphore(%2 : memref<!tpu.dma_semaphore, #tpu.memory_space<semaphore_mem>>)
    %c1_i32 = arith.constant 1 : i32
    %c0_i32_2 = arith.constant 0 : i32
    %c4096_i32 = arith.constant 4096 : i32
    %3 = tpu.memref_slice %arg3[%c0_i32_2, %c4096_i32] : memref<8x7168xf32, #tpu.memory_space<any>> -> memref<8x2048xf32, #tpu.memory_space<any>>
    %4 = tpu.memref_slice %arg4[%c1_i32] : memref<3x!tpu.dma_semaphore, #tpu.memory_space<semaphore_mem>> -> memref<1x!tpu.dma_semaphore, #tpu.memory_space<semaphore_mem>>
    %5 = tpu.memref_squeeze %4 : memref<1x!tpu.dma_semaphore, #tpu.memory_space<semaphore_mem>> -> memref<!tpu.dma_semaphore, #tpu.memory_space<semaphore_mem>>
    tpu.enqueue_dma source(%arg1 : memref<8x2048xf32, #tpu.memory_space<any>>) target(%3 : memref<8x2048xf32, #tpu.memory_space<any>>) target_semaphore(%5 : memref<!tpu.dma_semaphore, #tpu.memory_space<semaphore_mem>>)
    %c2_i32 = arith.constant 2 : i32
    %c0_i32_3 = arith.constant 0 : i32
    %c6144_i32 = arith.constant 6144 : i32
    %6 = tpu.memref_slice %arg3[%c0_i32_3, %c6144_i32] : memref<8x7168xf32, #tpu.memory_space<any>> -> memref<8x1024xf32, #tpu.memory_space<any>>
    %7 = tpu.memref_slice %arg4[%c2_i32] : memref<3x!tpu.dma_semaphore, #tpu.memory_space<semaphore_mem>> -> memref<1x!tpu.dma_semaphore, #tpu.memory_space<semaphore_mem>>
    %8 = tpu.memref_squeeze %7 : memref<1x!tpu.dma_semaphore, #tpu.memory_space<semaphore_mem>> -> memref<!tpu.dma_semaphore, #tpu.memory_space<semaphore_mem>>
    tpu.enqueue_dma source(%arg2 : memref<8x1024xf32, #tpu.memory_space<any>>) target(%6 : memref<8x1024xf32, #tpu.memory_space<any>>) target_semaphore(%8 : memref<!tpu.dma_semaphore, #tpu.memory_space<semaphore_mem>>)
    %c0_i32_4 = arith.constant 0 : i32
    %c0_i32_5 = arith.constant 0 : i32
    %c0_i32_6 = arith.constant 0 : i32
    %9 = tpu.memref_slice %arg3[%c0_i32_5, %c0_i32_6] : memref<8x7168xf32, #tpu.memory_space<any>> -> memref<8x4096xf32, #tpu.memory_space<any>>
    %10 = tpu.memref_slice %arg4[%c0_i32_4] : memref<3x!tpu.dma_semaphore, #tpu.memory_space<semaphore_mem>> -> memref<1x!tpu.dma_semaphore, #tpu.memory_space<semaphore_mem>>
    %11 = tpu.memref_squeeze %10 : memref<1x!tpu.dma_semaphore, #tpu.memory_space<semaphore_mem>> -> memref<!tpu.dma_semaphore, #tpu.memory_space<semaphore_mem>>
    tpu.wait_dma2 semaphore(%11 : memref<!tpu.dma_semaphore, #tpu.memory_space<semaphore_mem>>) src(%arg0 : memref<8x4096xf32, #tpu.memory_space<any>>) dst(%9 : memref<8x4096xf32, #tpu.memory_space<any>>)
    %c1_i32_7 = arith.constant 1 : i32
    %c0_i32_8 = arith.constant 0 : i32
    %c4096_i32_9 = arith.constant 4096 : i32
    %12 = tpu.memref_slice %arg3[%c0_i32_8, %c4096_i32_9] : memref<8x7168xf32, #tpu.memory_space<any>> -> memref<8x2048xf32, #tpu.memory_space<any>>
    %13 = tpu.memref_slice %arg4[%c1_i32_7] : memref<3x!tpu.dma_semaphore, #tpu.memory_space<semaphore_mem>> -> memref<1x!tpu.dma_semaphore, #tpu.memory_space<semaphore_mem>>
    %14 = tpu.memref_squeeze %13 : memref<1x!tpu.dma_semaphore, #tpu.memory_space<semaphore_mem>> -> memref<!tpu.dma_semaphore, #tpu.memory_space<semaphore_mem>>
    tpu.wait_dma2 semaphore(%14 : memref<!tpu.dma_semaphore, #tpu.memory_space<semaphore_mem>>) src(%arg1 : memref<8x2048xf32, #tpu.memory_space<any>>) dst(%12 : memref<8x2048xf32, #tpu.memory_space<any>>)
    %c2_i32_10 = arith.constant 2 : i32
    %c0_i32_11 = arith.constant 0 : i32
    %c6144_i32_12 = arith.constant 6144 : i32
    %15 = tpu.memref_slice %arg3[%c0_i32_11, %c6144_i32_12] : memref<8x7168xf32, #tpu.memory_space<any>> -> memref<8x1024xf32, #tpu.memory_space<any>>
    %16 = tpu.memref_slice %arg4[%c2_i32_10] : memref<3x!tpu.dma_semaphore, #tpu.memory_space<semaphore_mem>> -> memref<1x!tpu.dma_semaphore, #tpu.memory_space<semaphore_mem>>
    %17 = tpu.memref_squeeze %16 : memref<1x!tpu.dma_semaphore, #tpu.memory_space<semaphore_mem>> -> memref<!tpu.dma_semaphore, #tpu.memory_space<semaphore_mem>>
    tpu.wait_dma2 semaphore(%17 : memref<!tpu.dma_semaphore, #tpu.memory_space<semaphore_mem>>) src(%arg2 : memref<8x1024xf32, #tpu.memory_space<any>>) dst(%15 : memref<8x1024xf32, #tpu.memory_space<any>>)
    return
  }
}

</mosaic_0001>

<llo_original>
// kernel: tpu_custom_call.1
$region0: #{tpu_custom_call.1}
  #allocation0 [shape = 'u32[]', space=smem, size = 0x4, offset = 0x4, fixed_abs, tag = 'smem constant byte address 0x4 - core index']
  #allocation1 [shape = 'u32[144,128]{1,0:T(1,128)}', space=vmem, size = 0x12000, scoped, tag = 'internal scratch']
  #allocation2 [shape = 's32[3]{0}', space=sflag, size = 0xc, scoped, tag = 'scratch operand']
  #allocation3 [shape = 's32[]', space=sflag, size = 0x4, offset = 0, fixed_abs, tag = 'sflag constant byte address 0x0 - dummy sync flag']
  #allocation4 [shape = 'u32[0]{0}', space=smem, size = 0, offset = 0, fixed_abs, tag = 'smem constant byte address 0x0 - null']
  #allocation5 [shape = 's32[]', space=sflag, size = 0x4, offset = 0, fixed_abs, tag = 'sflag constant byte address 0x0 - dummy sync flag']
  #allocation6 [shape = 'u32[0]{0}', space=smem, size = 0, offset = 0, fixed_abs, tag = 'smem constant byte address 0x0 - null']
  #allocation7 [shape = 's32[]', space=sflag, size = 0x4, offset = 0, fixed_abs, tag = 'sflag constant byte address 0x0 - dummy sync flag']
  #allocation8 [shape = 'u32[0]{0}', space=smem, size = 0, offset = 0, fixed_abs, tag = 'smem constant byte address 0x0 - null']
  %s0 = inlined_call_operand.hbm [shape: f32[8,4096], index: 0, kind: input, shape index: {}]
  %s1 = inlined_call_operand.hbm [shape: f32[8,2048], index: 1, kind: input, shape index: {}]
  %s2 = inlined_call_operand.hbm [shape: f32[8,1024], index: 2, kind: input, shape index: {}]
  %s3 = inlined_call_operand.hbm [shape: f32[8,7168], index: 3, kind: output, shape index: {}]
  %s4 = sld [smem:[#allocation0]]
  $region2: #{tpu_custom_call.1} parent=0
    _
  %s6 = ssub.s32 1, %s4
  %s7 = scalar_select 0, %s6, %s4
  %s9 = sshll.u32 1, 14
  %s10 = sxor.u32 4294967295, %s9
  %s13 = sshll.u32 3, 24
  %s14 = sxor.u32 4294967295, %s13
  %s15 = sand.u32 0, %s14
  %s17 = sor.u32 %s15, 0
  %20 = dma.general %s0, 4096, %s3, [#allocation2], [#allocation3], [#allocation4], %s17, 0
  %s21 = scalar_lea.hbm %s3, 4096
  %s22 = scalar_lea.sflag [#allocation2], 1
  %s24 = sshll.u32 1, 14
  %s25 = sxor.u32 4294967295, %s24
  %s28 = sshll.u32 3, 24
  %s29 = sxor.u32 4294967295, %s28
  %s30 = sand.u32 0, %s29
  %s32 = sor.u32 %s30, 0
  %35 = dma.general %s1, 2048, %s21, %s22, [#allocation5], [#allocation6], %s32, 0
  %s36 = scalar_lea.hbm %s3, 6144
  %s37 = scalar_lea.sflag [#allocation2], 2
  %s39 = sshll.u32 1, 14
  %s40 = sxor.u32 4294967295, %s39
  %s43 = sshll.u32 3, 24
  %s44 = sxor.u32 4294967295, %s43
  %s45 = sand.u32 0, %s44
  %s47 = sor.u32 %s45, 0
  %50 = dma.general %s2, 1024, %s36, %s37, [#allocation7], [#allocation8], %s47, 0
  %s51 = smul.u32 8, 1
  %s52 = smul.u32 %s51, 32
  %s53 = sshll.u32 %s52, 4
  %54 = dma.done [#allocation2], %s53
  %s55 = smul.u32 %s51, 16
  %s56 = sshll.u32 %s55, 4
  %57 = dma.done %s22, %s56
  %s58 = smul.u32 %s51, 8
  %s59 = sshll.u32 %s58, 4
  %60 = dma.done %s37, %s59
  %61 = vsyncmov [#allocation2]
  %s62 = vpop.sfrf %61
  %p63 = scmp.eq.s32.totalorder %s62, 0
  %p64 = pneg %p63
  %66 = shalt.err (%p64)
  %s67 = scalar_lea.sflag [#allocation2], 1
  %68 = vsyncmov %s67
  %s69 = vpop.sfrf %68
  %p70 = scmp.eq.s32.totalorder %s69, 0
  %p71 = pneg %p70
  %73 = shalt.err (%p71)
  %s74 = scalar_lea.sflag [#allocation2], 2
  %75 = vsyncmov %s74
  %s76 = vpop.sfrf %75
  %p77 = scmp.eq.s32.totalorder %s76, 0
  %p78 = pneg %p77
  %80 = shalt.err (%p78)

</llo_original>
